<compile_context>
chip_gen: v6e
topology: v6e:2x2x1
jax: 0.10.0
libtpu: 0.0.40
codegen_flags: <defaults>
</compile_context>

<pallas_src>
import functools

import jax
import jax.numpy as jnp
from jax.experimental import pallas as pl
from jax.experimental.pallas import tpu as pltpu

LANE = 128
SUBLANE = 8
# ~2 MiB per block (per array); big enough to sit near the HBM roofline,
# small enough that double-buffered in+out stays well under scoped VMEM on
# every generation (v5e 16 MiB default, v6e/v7x 32 MiB default).
_TARGET_BLOCK_BYTES = 2 * 1024 * 1024


def _lrelu_kernel(x_ref, o_ref, *, coe1, neg_coe2):
    x = x_ref[...]
    # Keep the compute in the input dtype (bf16 stays packed on v6e/v7x).
    pos = jnp.asarray(coe1, dtype=x.dtype)
    neg = jnp.asarray(neg_coe2, dtype=x.dtype)
    # coe1 * max(x, 0) + coe2 * max(-x, 0)  ==  x * (x >= 0 ? coe1 : -coe2)
    o_ref[...] = x * jnp.where(x >= 0, pos, neg)


def lrelu_pallas(x: jax.Array, coe1: float, coe2: float) -> jax.Array:
    """Applies coe1 * max(x, 0) + coe2 * max(-x, 0) elementwise via Pallas."""
    orig_shape = x.shape
    dtype = x.dtype
    n = x.size

    # Flatten; pad only up to a multiple of 128 lanes (and only if needed).
    x_flat = x.reshape(-1)
    pad = (-n) % LANE
    if pad:
        x_flat = jnp.concatenate([x_flat, jnp.zeros((pad,), dtype=dtype)])
    rows = (n + pad) // LANE
    x2d = x_flat.reshape(rows, LANE)

    # Block sizing: multiple of 8 sublanes, ~2 MiB per block.
    itemsize = jnp.dtype(dtype).itemsize
    max_block_rows = max(
        SUBLANE,
        (_TARGET_BLOCK_BYTES // (LANE * itemsize)) // SUBLANE * SUBLANE,
    )
    if rows <= max_block_rows:
        block_rows = rows  # block == full array dim: always a legal shape
    else:
        block_rows = max_block_rows  # multiple of 8; tail block masked by Pallas
    grid = (pl.cdiv(rows, block_rows),)

    kernel = functools.partial(
        _lrelu_kernel, coe1=float(coe1), neg_coe2=-float(coe2)
    )

    out2d = pl.pallas_call(
        kernel,
        out_shape=jax.ShapeDtypeStruct((rows, LANE), dtype),
        grid=grid,
        in_specs=[pl.BlockSpec((block_rows, LANE), lambda i: (i, 0))],
        out_specs=pl.BlockSpec((block_rows, LANE), lambda i: (i, 0)),
        compiler_params=pltpu.CompilerParams(
            dimension_semantics=("parallel",)
        ),
    )(x2d)

    if pad:
        return out2d.reshape(-1)[:n].reshape(orig_shape)
    return out2d.reshape(orig_shape)


if __name__ == "__main__":
    key = jax.random.PRNGKey(0)
    # Small NCHW-like input, consistent with a conv-activation use case.
    x = jax.random.normal(key, (2, 4, 16, 16), dtype=jnp.float32)

    coe1, coe2 = 1.0, -0.2  # arbitrary deterministic coefficients

    out = lrelu_pallas(x, coe1, coe2)
    out = jax.block_until_ready(out)

    # Reference check against plain JAX.
    ref = coe1 * jnp.maximum(x, 0.0) + coe2 * jnp.maximum(-x, 0.0)
    assert out.shape == x.shape and out.dtype == x.dtype
    assert jnp.allclose(out, ref, atol=1e-6, rtol=1e-6)

    # Extra check: a size that exercises partial tail blocks and the pad path.
    x2 = jax.random.normal(jax.random.PRNGKey(1), (3, 5, 17, 13), dtype=jnp.float32)
    out2 = jax.block_until_ready(lrelu_pallas(x2, coe1, coe2))
    ref2 = coe1 * jnp.maximum(x2, 0.0) + coe2 * jnp.maximum(-x2, 0.0)
    assert jnp.allclose(out2, ref2, atol=1e-6, rtol=1e-6)

    print("KERNEL_OK")
</pallas_src>

<mosaic_0001>
module attributes {stable_mosaic.version = 11 : i64} {
  func.func @_lrelu_kernel(%arg0: i32, %arg1: memref<16x128xf32, #tpu.memory_space<vmem>>, %arg2: memref<16x128xf32, #tpu.memory_space<vmem>>) attributes {dimension_semantics = [#tpu.dimension_semantics<parallel>], iteration_bounds = array<i64: 1>, scalar_prefetch = 0 : i64, scratch_operands = 0 : i64, tpu.core_type = #tpu.core_type<tc>, window_params = [{transform_indices = @transform_0, window_bounds = array<i64: 16, 128>}, {transform_indices = @transform_1, window_bounds = array<i64: 16, 128>}]} {
    %c0 = arith.constant 0 : index
    %c0_0 = arith.constant 0 : index
    %0 = vector.load %arg1[%c0, %c0_0] : memref<16x128xf32, #tpu.memory_space<vmem>>, vector<16x128xf32>
    %cst = arith.constant 0.000000e+00 : f32
    %1 = vector.broadcast %cst : f32 to vector<16x128xf32>
    %2 = arith.cmpf oge, %0, %1 : vector<16x128xf32>
    %cst_1 = arith.constant 1.000000e+00 : f32
    %cst_2 = arith.constant 2.000000e-01 : f32
    %3 = vector.broadcast %cst_1 : f32 to vector<16x128xf32>
    %4 = vector.broadcast %cst_2 : f32 to vector<16x128xf32>
    %5 = arith.select %2, %3, %4 : vector<16x128xi1>, vector<16x128xf32>
    %6 = arith.mulf %0, %5 : vector<16x128xf32>
    %c0_3 = arith.constant 0 : index
    %c0_4 = arith.constant 0 : index
    %7 = vector.load %arg2[%c0_3, %c0_4] : memref<16x128xf32, #tpu.memory_space<vmem>>, vector<16x128xf32>
    tpu.vector_store %arg2[%c0_3, %c0_4], %6 {strides = array<i32>} : memref<16x128xf32, #tpu.memory_space<vmem>>, vector<16x128xf32>,
    return
  }
  func.func @transform_0(%arg0: i32) -> (i32, i32) {
    %c0_i32 = arith.constant 0 : i32
    %c0_i32_0 = arith.constant 0 : i32
    return %arg0, %c0_i32 : i32, i32
  }
  func.func @transform_1(%arg0: i32) -> (i32, i32) {
    %c0_i32 = arith.constant 0 : i32
    %c0_i32_0 = arith.constant 0 : i32
    return %arg0, %c0_i32 : i32, i32
  }
}

</mosaic_0001>

<llo_original>
// kernel: tpu_custom_call.1
$region0: #{tpu_custom_call.1}
  #allocation0 [shape = 'u32[]', space=smem, size = 0x4, offset = 0x4, fixed_abs, tag = 'smem constant byte address 0x4 - core index']
  #allocation1 [shape = 'u32[144,128]{1,0:T(1,128)}', space=vmem, size = 0x12000, scoped, tag = 'internal scratch']
  %s0 = inlined_call_operand.hbm [shape: f32[16,128], index: 0, kind: input, shape index: {}]
  %s1 = inlined_call_operand.hbm [shape: f32[16,128], index: 1, kind: output, shape index: {}]
  %s2 = sld [smem:[#allocation0]]
  $region18: #{tpu_custom_call.1} parent=0
    _
  %s4 = ssub.s32 1, %s2
  %s5 = scalar_select 0, %s4, %s2
  $region1: #{tpu_custom_call.1} parent=0
    #allocation2 [shape = 'u8[8192]{0}', space=vmem, size = 0x2000, scoped, tag = 'input window, operand 0, single buffered']
    #allocation3 [shape = 's32[1]{0}', space=sflag, size = 0x4, scoped, tag = 'scoped memory for tpu_custom_call.1']
    #allocation4 [shape = 's32[1]{0}', space=sflag, size = 0x4, scoped, tag = 'scoped memory for tpu_custom_call.1']
    #allocation5 [shape = 'u8[8192]{0}', space=vmem, size = 0x2000, scoped, tag = 'output window, operand 0, single buffered']
    %6 = vsyncpa [#allocation3], 0
    %7 = vsyncpa [#allocation4], 0
    // Predicated region
    $region2: #{tpu_custom_call.1} parent=1 // pred_check
      _
    $region3: #{tpu_custom_call.1} parent=1 // pred_check_branch
      %9 = sbr.rel (0) target = $region5
    $region4: #{tpu_custom_call.1} parent=1 // pred_region
      %s11 = ssub.s32 256, 256
      %12 = vsyncadd [#allocation3], %s11
      %s13 = sshll.u32 [#allocation2], 4
      %s14 = int_to_ptr.vmem [resolvable:$true] %s13
      %19 = dma.hbm_to_vmem [thread:$0]  %s0, 256, %s14, [#allocation3], 128, 128, 8
    $region5: #{tpu_custom_call.1} parent=1 // pred_fallthru
      _
    // Predicated region
    $region6: #{tpu_custom_call.1} parent=1 // pred_check
      _
    $region7: #{tpu_custom_call.1} parent=1 // pred_check_branch
      %21 = sbr.rel (0) target = $region9
    $region8: #{tpu_custom_call.1} parent=1 // pred_region
      %22 = dma.done [#allocation3], 256
    $region9: #{tpu_custom_call.1} parent=1 // pred_fallthru
      _
    %v23 = vld [vmem:[#allocation2] sm:$0xff]
    %v24 = vld [vmem:[#allocation2 + $0x8] sm:$0xff]
    %vm25 = vcmp.ge.f32.partialorder %v23, 0.0
    %vm26 = vcmp.ge.f32.partialorder %v24, 0.0
    %v27 = vsel %vm25, 1.0, 0.2
    %v28 = vsel %vm26, 1.0, 0.2
    %v29 = vmul.f32 %v23, %v27
    %v30 = vmul.f32 %v24, %v28
    %31 = vst [vmem:[#allocation5] sm:$0xff] %v29
    %32 = vst [vmem:[#allocation5 + $0x8] sm:$0xff] %v30
    // Predicated region
    $region10: #{tpu_custom_call.1} parent=1 // pred_check
      _
    $region11: #{tpu_custom_call.1} parent=1 // pred_check_branch
      %34 = sbr.rel (0) target = $region13
    $region12: #{tpu_custom_call.1} parent=1 // pred_region
      %s36 = ssub.s32 256, 256
      %37 = vsyncadd [#allocation4], %s36
      %s38 = sshll.u32 [#allocation5], 4
      %s39 = int_to_ptr.vmem [resolvable:$true] %s38
      %44 = dma.vmem_to_hbm [thread:$0]  %s39, 256, %s1, [#allocation4], 128, 128, 8
    $region13: #{tpu_custom_call.1} parent=1 // pred_fallthru
      _
    // Predicated region
    $region14: #{tpu_custom_call.1} parent=1 // pred_check
      _
    $region15: #{tpu_custom_call.1} parent=1 // pred_check_branch
      %46 = sbr.rel (0) target = $region17
    $region16: #{tpu_custom_call.1} parent=1 // pred_region
      %47 = dma.done [#allocation4], 256
    $region17: #{tpu_custom_call.1} parent=1 // pred_fallthru
      _
    %48 = vsyncpa [#allocation3], 1
    %49 = vsyncpa [#allocation4], 1

</llo_original>
